<compile_context>
chip_gen: v5e
topology: v5e:2x2
jax: 0.10.0
libtpu: 0.0.40
codegen_flags: <defaults>
</compile_context>

<pallas_src>
import functools

import jax
import jax.numpy as jnp
import numpy as np
from jax.experimental import pallas as pl
from jax.experimental.pallas import tpu as pltpu


def _bot_opinion_kernel(*refs, nseg, use_dropout):
    idx = 0
    if use_dropout:
        mask_ref = refs[idx]
        idx += 1
    x_refs = refs[idx:idx + nseg]
    idx += nseg
    w1_refs = refs[idx:idx + nseg]
    idx += nseg
    b1_ref, w2_ref, b2_ref = refs[idx:idx + 3]
    outp_ref, prob_ref = refs[idx + 3:idx + 5]

    # hid2state: the torch.cat is fused as a sum of per-segment partial dots.
    # Weights are bf16 in (K_i, S) layout; activations cast to bf16 only if
    # needed (pass bf16 inputs from the producer to halve HBM traffic).
    h = None
    for xr, wr in zip(x_refs, w1_refs):
        x = xr[...]
        if x.dtype != jnp.bfloat16:
            x = x.astype(jnp.bfloat16)
        part = jnp.dot(x, wr[...], preferred_element_type=jnp.float32)
        h = part if h is None else h + part
    h = jnp.tanh(h + b1_ref[...])            # activation math stays f32

    if use_dropout:
        # Pre-scaled keep-mask (0 or 1/(1-p)) generated wrapper-side.
        h = h * mask_ref[...]

    outp_ref[...] = h.astype(outp_ref.dtype)

    # state2probL + softmax(dim=1): tiny (S=16 -> C=8) contraction, all f32,
    # exact divide so probability rows are properly normalized.
    logits = jnp.dot(h, w2_ref[...], preferred_element_type=jnp.float32)
    logits = logits + b2_ref[...]
    m = jnp.max(logits, axis=-1, keepdims=True)
    e = jnp.exp(logits - m)
    prob_ref[...] = (e / jnp.sum(e, axis=-1, keepdims=True)).astype(prob_ref.dtype)


def prepare_params(w1, b1, w2, b2, dim, statedim):
    """Convert math-layout f32 params into the kernel layout (done once, offline).

    w1 (K_total, S) is split/merged into three (K_i, S) bf16 segments matching
    the fused kernel inputs:
        seg0 = bot_bert_cls rows (1024)
        seg1 = bot_word_vec rows (1024)
        seg2 = [pos_vec ; opinion_vec ; memory ; target] rows (25+dim+2*statedim)
    b1 (1, S), w2 (S, C), b2 (1, C) stay f32 (second matmul is negligible).
    """
    w1 = jnp.asarray(w1, jnp.float32)
    widths = (25, 1024, 1024, dim, statedim, statedim)   # torch.cat order
    offs = np.cumsum((0,) + widths)
    seg_bert = w1[offs[1]:offs[2]]
    seg_word = w1[offs[2]:offs[3]]
    seg_small = jnp.concatenate([w1[offs[0]:offs[1]],     # pos_vec
                                 w1[offs[3]:offs[4]],     # opinion_vec
                                 w1[offs[4]:offs[5]],     # memory
                                 w1[offs[5]:offs[6]]],    # target
                                axis=0)
    w1_segs = tuple(s.astype(jnp.bfloat16) for s in (seg_bert, seg_word, seg_small))
    return (w1_segs, jnp.asarray(b1, jnp.float32),
            jnp.asarray(w2, jnp.float32), jnp.asarray(b2, jnp.float32))


def bot_opinion_forward(pos_vec, bot_bert_cls, opinion_vec, bot_word_vec,
                        memory, target, kernel_params, *, training=False,
                        dropout=0.0, rng_key=None, block_b=512,
                        vmem_limit_bytes=32 * 1024 * 1024):
    """Pallas forward pass.

    Tiling guidance per generation (the kernel is HBM-read bound on the x
    segments): block_b=512 fits the default scoped-VMEM limit on v5e (16 MiB)
    and v7x (32 MiB of 64 MiB physical) and already sits near the HBM
    roofline; on v6e block_b=1024 with vmem_limit_bytes≈48<<20 amortizes a
    bit more per-step overhead.  Choose block_b so pl.cdiv(B, block_b) >= 2
    on v7x to shard the batch grid across both TensorCores.
    """
    w1_segs, b1, w2, b2 = kernel_params

    # Fuse the four narrow segments into one 89-wide input (cheap wrapper-side
    # concat); order must match prepare_params' row merge.
    small = jnp.concatenate([pos_vec, opinion_vec, memory, target], axis=1)
    segments = (bot_bert_cls, bot_word_vec, small)
    nseg = len(segments)
    assert len(w1_segs) == nseg
    for x, w in zip(segments, w1_segs):
        assert x.shape[1] == w.shape[0], (x.shape, w.shape)

    B = segments[0].shape[0]
    S = w1_segs[0].shape[1]
    C = w2.shape[1]
    K_total = sum(s.shape[1] for s in segments)

    use_dropout = bool(training) and float(dropout) > 0.0
    tb = min(B, int(block_b))
    nb = pl.cdiv(B, tb)            # ragged last block handled by Pallas

    kernel = functools.partial(_bot_opinion_kernel, nseg=nseg,
                               use_dropout=use_dropout)

    def batch_spec(cols):
        return pl.BlockSpec((tb, cols), lambda b: (b, 0))

    def const_spec(shape):
        # Constant index_map -> weights stay VMEM-resident across grid steps.
        return pl.BlockSpec(shape, lambda b: (0, 0))

    in_specs = []
    args = []
    if use_dropout:
        if rng_key is None:
            rng_key = jax.random.PRNGKey(0)
        # F.dropout (inverted): keep with prob 1-p, scale kept values by 1/(1-p).
        keep = jax.random.bernoulli(rng_key, 1.0 - float(dropout), (B, S))
        mask = keep.astype(jnp.float32) * jnp.float32(1.0 / (1.0 - float(dropout)))
        in_specs.append(batch_spec(S))
        args.append(mask)
    in_specs += [batch_spec(s.shape[1]) for s in segments]
    args += list(segments)
    in_specs += [const_spec(w.shape) for w in w1_segs]
    args += list(w1_segs)
    in_specs += [const_spec(b1.shape), const_spec(w2.shape), const_spec(b2.shape)]
    args += [b1, w2, b2]

    out_specs = (batch_spec(S), batch_spec(C))

    bytes_accessed = int(sum(int(np.prod(a.shape)) * a.dtype.itemsize for a in args)
                         + 4 * B * (S + C))
    cost = pl.CostEstimate(flops=int(2 * B * K_total * S + 2 * B * S * C),
                           transcendentals=int(B * (S + C)),
                           bytes_accessed=bytes_accessed)

    grid_spec = pltpu.PrefetchScalarGridSpec(
        num_scalar_prefetch=0,
        grid=(nb,),
        in_specs=in_specs,
        out_specs=out_specs)

    call = pl.pallas_call(
        kernel,
        out_shape=(jax.ShapeDtypeStruct((B, S), jnp.float32),
                   jax.ShapeDtypeStruct((B, C), jnp.float32)),
        grid_spec=grid_spec,
        compiler_params=pltpu.CompilerParams(
            dimension_semantics=("parallel",),
            vmem_limit_bytes=int(vmem_limit_bytes)),
        cost_estimate=cost)

    return call(*args)


def init_params(key, in_features, statedim, opinion_count):
    """Math-layout f32 params mimicking nn.Linear default init (uniform +-1/sqrt(fan_in)).

    w1: (in_features, statedim), w2: (statedim, opinion_count)."""
    k1, k2, k3, k4 = jax.random.split(key, 4)
    lim1 = 1.0 / np.sqrt(in_features)
    lim2 = 1.0 / np.sqrt(statedim)
    w1 = jax.random.uniform(k1, (in_features, statedim), jnp.float32, -lim1, lim1)
    b1 = jax.random.uniform(k2, (1, statedim), jnp.float32, -lim1, lim1)
    w2 = jax.random.uniform(k3, (statedim, opinion_count), jnp.float32, -lim2, lim2)
    b2 = jax.random.uniform(k4, (1, opinion_count), jnp.float32, -lim2, lim2)
    return w1, b1, w2, b2


def _reference(segments, w1, b1, w2, b2):
    """Plain-JAX f32 reference (eval mode: dropout is identity)."""
    inp = jnp.concatenate(segments, axis=1)
    outp = jnp.tanh(inp @ w1 + b1)
    prob = jax.nn.softmax(outp @ w2 + b2, axis=1)
    return outp, prob


if __name__ == "__main__":
    # Module hyper-parameters; in_features = dim + statedim*2 + 1024*2 + 25.
    dim, statedim, opinion_count = 32, 16, 8
    batch = 2
    in_features = dim + statedim * 2 + 1024 * 2 + 25   # 2137

    key = jax.random.PRNGKey(0)
    kp, kx, kd = jax.random.split(key, 3)
    w1, b1, w2, b2 = init_params(kp, in_features, statedim, opinion_count)
    kernel_params = prepare_params(w1, b1, w2, b2, dim, statedim)

    ks = jax.random.split(kx, 6)
    pos_vec      = jax.random.normal(ks[0], (batch, 25), jnp.float32)
    bot_bert_cls = jax.random.normal(ks[1], (batch, 1024), jnp.float32)
    bot_word_vec = jax.random.normal(ks[2], (batch, 1024), jnp.float32)
    opinion_vec  = jax.random.normal(ks[3], (batch, dim), jnp.float32)
    memory       = jax.random.normal(ks[4], (batch, statedim), jnp.float32)
    target       = jax.random.normal(ks[5], (batch, statedim), jnp.float32)

    # --- Eval mode: check against the f32 reference (bf16 w1 -> ~2e-2 tol).
    outp, prob = bot_opinion_forward(pos_vec, bot_bert_cls, opinion_vec,
                                     bot_word_vec, memory, target,
                                     kernel_params, training=False, dropout=0.5)
    jax.block_until_ready((outp, prob))

    segments_ref = (pos_vec, bot_bert_cls, bot_word_vec, opinion_vec, memory, target)
    ref_outp, ref_prob = _reference(segments_ref, w1, b1, w2, b2)
    np.testing.assert_allclose(np.asarray(outp), np.asarray(ref_outp),
                               rtol=2e-2, atol=2e-2)
    np.testing.assert_allclose(np.asarray(prob), np.asarray(ref_prob),
                               rtol=2e-2, atol=2e-2)
    np.testing.assert_allclose(np.asarray(prob).sum(axis=1), np.ones(batch),
                               rtol=1e-5, atol=1e-5)
    assert outp.shape == (batch, statedim) and prob.shape == (batch, opinion_count)

    # --- Training mode: exercise the dropout path and sanity-check it.
    outp_tr, prob_tr = bot_opinion_forward(pos_vec, bot_bert_cls, opinion_vec,
                                           bot_word_vec, memory, target,
                                           kernel_params, training=True,
                                           dropout=0.5, rng_key=kd)
    jax.block_until_ready((outp_tr, prob_tr))
    outp_tr_np = np.asarray(outp_tr)
    prob_tr_np = np.asarray(prob_tr)
    nz = int(np.sum(outp_tr_np == 0.0))
    assert 0 < nz < outp_tr_np.size, f"unexpected dropout zero count: {nz}"
    assert np.all(np.isfinite(outp_tr_np)) and np.all(np.isfinite(prob_tr_np))
    np.testing.assert_allclose(prob_tr_np.sum(axis=1), np.ones(batch),
                               rtol=1e-5, atol=1e-5)

    print("KERNEL_OK")
</pallas_src>

<mosaic_0001>
module attributes {stable_mosaic.version = 11 : i64} {
  func.func @_bot_opinion_kernel(%arg0: i32, %arg1: memref<2x1024xf32, #tpu.memory_space<vmem>>, %arg2: memref<2x1024xf32, #tpu.memory_space<vmem>>, %arg3: memref<2x89xf32, #tpu.memory_space<vmem>>, %arg4: memref<1024x16xbf16, #tpu.memory_space<vmem>>, %arg5: memref<1024x16xbf16, #tpu.memory_space<vmem>>, %arg6: memref<89x16xbf16, #tpu.memory_space<vmem>>, %arg7: memref<1x16xf32, #tpu.memory_space<vmem>>, %arg8: memref<16x8xf32, #tpu.memory_space<vmem>>, %arg9: memref<1x8xf32, #tpu.memory_space<vmem>>, %arg10: memref<2x16xf32, #tpu.memory_space<vmem>>, %arg11: memref<2x8xf32, #tpu.memory_space<vmem>>) attributes {dimension_semantics = [#tpu.dimension_semantics<parallel>], iteration_bounds = array<i64: 1>, scalar_prefetch = 0 : i64, scratch_operands = 0 : i64, tpu.core_type = #tpu.core_type<tc>, window_params = [{transform_indices = @transform_0, window_bounds = array<i64: 2, 1024>}, {transform_indices = @transform_1, window_bounds = array<i64: 2, 1024>}, {transform_indices = @transform_2, window_bounds = array<i64: 2, 89>}, {pipeline_mode = #tpu.pipeline_mode<synchronous>, transform_indices = @transform_3, window_bounds = array<i64: 1024, 16>}, {pipeline_mode = #tpu.pipeline_mode<synchronous>, transform_indices = @transform_4, window_bounds = array<i64: 1024, 16>}, {pipeline_mode = #tpu.pipeline_mode<synchronous>, transform_indices = @transform_5, window_bounds = array<i64: 89, 16>}, {pipeline_mode = #tpu.pipeline_mode<synchronous>, transform_indices = @transform_6, window_bounds = array<i64: 1, 16>}, {pipeline_mode = #tpu.pipeline_mode<synchronous>, transform_indices = @transform_7, window_bounds = array<i64: 16, 8>}, {pipeline_mode = #tpu.pipeline_mode<synchronous>, transform_indices = @transform_8, window_bounds = array<i64: 1, 8>}, {transform_indices = @transform_9, window_bounds = array<i64: 2, 16>}, {transform_indices = @transform_10, window_bounds = array<i64: 2, 8>}]} {
    %c0 = arith.constant 0 : index
    %c0_0 = arith.constant 0 : index
    %0 = vector.load %arg1[%c0, %c0_0] : memref<2x1024xf32, #tpu.memory_space<vmem>>, vector<2x1024xf32>
    %1 = arith.truncf %0 : vector<2x1024xf32> to vector<2x1024xbf16>
    %c0_1 = arith.constant 0 : index
    %c0_2 = arith.constant 0 : index
    %2 = vector.load %arg4[%c0_1, %c0_2] : memref<1024x16xbf16, #tpu.memory_space<vmem>>, vector<1024x16xbf16>
    %cst = arith.constant dense<0.000000e+00> : vector<2x16xf32>
    %3 = tpu.matmul %1, %2, %cst {dimension_numbers = #tpu.dot_dimension_numbers<[1], [0], [0], [1], [0, 0, 1, 1], [], []>} : vector<2x1024xbf16>, vector<1024x16xbf16>, vector<2x16xf32> -> vector<2x16xf32>
    %c0_3 = arith.constant 0 : index
    %c0_4 = arith.constant 0 : index
    %4 = vector.load %arg2[%c0_3, %c0_4] : memref<2x1024xf32, #tpu.memory_space<vmem>>, vector<2x1024xf32>
    %5 = arith.truncf %4 : vector<2x1024xf32> to vector<2x1024xbf16>
    %c0_5 = arith.constant 0 : index
    %c0_6 = arith.constant 0 : index
    %6 = vector.load %arg5[%c0_5, %c0_6] : memref<1024x16xbf16, #tpu.memory_space<vmem>>, vector<1024x16xbf16>
    %cst_7 = arith.constant dense<0.000000e+00> : vector<2x16xf32>
    %7 = tpu.matmul %5, %6, %cst_7 {dimension_numbers = #tpu.dot_dimension_numbers<[1], [0], [0], [1], [0, 0, 1, 1], [], []>} : vector<2x1024xbf16>, vector<1024x16xbf16>, vector<2x16xf32> -> vector<2x16xf32>
    %8 = arith.addf %3, %7 : vector<2x16xf32>
    %c0_8 = arith.constant 0 : index
    %c0_9 = arith.constant 0 : index
    %9 = vector.load %arg3[%c0_8, %c0_9] : memref<2x89xf32, #tpu.memory_space<vmem>>, vector<2x89xf32>
    %10 = arith.truncf %9 : vector<2x89xf32> to vector<2x89xbf16>
    %c0_10 = arith.constant 0 : index
    %c0_11 = arith.constant 0 : index
    %11 = vector.load %arg6[%c0_10, %c0_11] : memref<89x16xbf16, #tpu.memory_space<vmem>>, vector<89x16xbf16>
    %cst_12 = arith.constant dense<0.000000e+00> : vector<2x16xf32>
    %12 = tpu.matmul %10, %11, %cst_12 {dimension_numbers = #tpu.dot_dimension_numbers<[1], [0], [0], [1], [0, 0, 1, 1], [], []>} : vector<2x89xbf16>, vector<89x16xbf16>, vector<2x16xf32> -> vector<2x16xf32>
    %13 = arith.addf %8, %12 : vector<2x16xf32>
    %c0_13 = arith.constant 0 : index
    %c0_14 = arith.constant 0 : index
    %14 = vector.load %arg7[%c0_13, %c0_14] : memref<1x16xf32, #tpu.memory_space<vmem>>, vector<1x16xf32>
    %15 = vector.broadcast %14 : vector<1x16xf32> to vector<2x16xf32>
    %16 = arith.addf %13, %15 : vector<2x16xf32>
    %17 = math.tanh %16 : vector<2x16xf32>
    %c0_15 = arith.constant 0 : index
    %c0_16 = arith.constant 0 : index
    %18 = vector.load %arg10[%c0_15, %c0_16] : memref<2x16xf32, #tpu.memory_space<vmem>>, vector<2x16xf32>
    tpu.vector_store %arg10[%c0_15, %c0_16], %17 {strides = array<i32>} : memref<2x16xf32, #tpu.memory_space<vmem>>, vector<2x16xf32>,
    %c0_17 = arith.constant 0 : index
    %c0_18 = arith.constant 0 : index
    %19 = vector.load %arg8[%c0_17, %c0_18] : memref<16x8xf32, #tpu.memory_space<vmem>>, vector<16x8xf32>
    %cst_19 = arith.constant dense<0.000000e+00> : vector<2x8xf32>
    %20 = tpu.matmul %17, %19, %cst_19 {dimension_numbers = #tpu.dot_dimension_numbers<[1], [0], [0], [1], [0, 0, 1, 1], [], []>} : vector<2x16xf32>, vector<16x8xf32>, vector<2x8xf32> -> vector<2x8xf32>
    %c0_20 = arith.constant 0 : index
    %c0_21 = arith.constant 0 : index
    %21 = vector.load %arg9[%c0_20, %c0_21] : memref<1x8xf32, #tpu.memory_space<vmem>>, vector<1x8xf32>
    %22 = vector.broadcast %21 : vector<1x8xf32> to vector<2x8xf32>
    %23 = arith.addf %20, %22 : vector<2x8xf32>
    %cst_22 = arith.constant dense<0xFF800000> : vector<2xf32>
    %24 = vector.multi_reduction <maximumf>, %23, %cst_22 [1] : vector<2x8xf32> to vector<2xf32>
    %25 = vector.shape_cast %24 : vector<2xf32> to vector<2x1xf32>
    %26 = vector.broadcast %25 : vector<2x1xf32> to vector<2x8xf32>
    %27 = arith.subf %23, %26 : vector<2x8xf32>
    %28 = math.exp %27 : vector<2x8xf32>
    %cst_23 = arith.constant dense<0.000000e+00> : vector<2xf32>
    %29 = vector.multi_reduction <add>, %28, %cst_23 [1] : vector<2x8xf32> to vector<2xf32>
    %30 = vector.shape_cast %29 : vector<2xf32> to vector<2x1xf32>
    %31 = vector.broadcast %30 : vector<2x1xf32> to vector<2x8xf32>
    %32 = arith.divf %28, %31 : vector<2x8xf32>
    %c0_24 = arith.constant 0 : index
    %c0_25 = arith.constant 0 : index
    %33 = vector.load %arg11[%c0_24, %c0_25] : memref<2x8xf32, #tpu.memory_space<vmem>>, vector<2x8xf32>
    tpu.vector_store %arg11[%c0_24, %c0_25], %32 {strides = array<i32>} : memref<2x8xf32, #tpu.memory_space<vmem>>, vector<2x8xf32>,
    return
  }
  func.func @transform_0(%arg0: i32) -> (i32, i32) {
    %c0_i32 = arith.constant 0 : i32
    %c0_i32_0 = arith.constant 0 : i32
    return %arg0, %c0_i32 : i32, i32
  }
  func.func @transform_1(%arg0: i32) -> (i32, i32) {
    %c0_i32 = arith.constant 0 : i32
    %c0_i32_0 = arith.constant 0 : i32
    return %arg0, %c0_i32 : i32, i32
  }
  func.func @transform_2(%arg0: i32) -> (i32, i32) {
    %c0_i32 = arith.constant 0 : i32
    %c0_i32_0 = arith.constant 0 : i32
    return %arg0, %c0_i32 : i32, i32
  }
  func.func @transform_3(%arg0: i32) -> (i32, i32) {
    %c0_i32 = arith.constant 0 : i32
    %c0_i32_0 = arith.constant 0 : i32
    %c0_i32_1 = arith.constant 0 : i32
    return %c0_i32, %c0_i32_0 : i32, i32
  }
  func.func @transform_4(%arg0: i32) -> (i32, i32) {
    %c0_i32 = arith.constant 0 : i32
    %c0_i32_0 = arith.constant 0 : i32
    %c0_i32_1 = arith.constant 0 : i32
    return %c0_i32, %c0_i32_0 : i32, i32
  }
  func.func @transform_5(%arg0: i32) -> (i32, i32) {
    %c0_i32 = arith.constant 0 : i32
    %c0_i32_0 = arith.constant 0 : i32
    %c0_i32_1 = arith.constant 0 : i32
    return %c0_i32, %c0_i32_0 : i32, i32
  }
  func.func @transform_6(%arg0: i32) -> (i32, i32) {
    %c0_i32 = arith.constant 0 : i32
    %c0_i32_0 = arith.constant 0 : i32
    %c0_i32_1 = arith.constant 0 : i32
    return %c0_i32, %c0_i32_0 : i32, i32
  }
  func.func @transform_7(%arg0: i32) -> (i32, i32) {
    %c0_i32 = arith.constant 0 : i32
    %c0_i32_0 = arith.constant 0 : i32
    %c0_i32_1 = arith.constant 0 : i32
    return %c0_i32, %c0_i32_0 : i32, i32
  }
  func.func @transform_8(%arg0: i32) -> (i32, i32) {
    %c0_i32 = arith.constant 0 : i32
    %c0_i32_0 = arith.constant 0 : i32
    %c0_i32_1 = arith.constant 0 : i32
    return %c0_i32, %c0_i32_0 : i32, i32
  }
  func.func @transform_9(%arg0: i32) -> (i32, i32) {
    %c0_i32 = arith.constant 0 : i32
    %c0_i32_0 = arith.constant 0 : i32
    return %arg0, %c0_i32 : i32, i32
  }
  func.func @transform_10(%arg0: i32) -> (i32, i32) {
    %c0_i32 = arith.constant 0 : i32
    %c0_i32_0 = arith.constant 0 : i32
    return %arg0, %c0_i32 : i32, i32
  }
}

</mosaic_0001>

<llo_original>
// kernel: tpu_custom_call.1
$region0: #{tpu_custom_call.1}
  #allocation0 [shape = 'u32[]', space=smem, size = 0x4, offset = 0x4, fixed_abs, tag = 'smem constant byte address 0x4 - core index']
  #allocation1 [shape = 'u32[72,128]{1,0:T(1,128)}', space=vmem, size = 0x9000, scoped, tag = 'internal scratch']
  %s0 = inlined_call_operand.vmem [shape: f32[2,1024], index: 0, kind: input, shape index: {}]
  %s1 = inlined_call_operand.vmem [shape: f32[2,1024], index: 1, kind: input, shape index: {}]
  %s2 = inlined_call_operand.vmem [shape: f32[2,89], index: 2, kind: input, shape index: {}]
  %s3 = inlined_call_operand.vmem [shape: bf16[1024,16], index: 3, kind: input, shape index: {}]
  %s4 = inlined_call_operand.vmem [shape: bf16[1024,16], index: 4, kind: input, shape index: {}]
  %s5 = inlined_call_operand.vmem [shape: bf16[89,16], index: 5, kind: input, shape index: {}]
  %s6 = inlined_call_operand.vmem [shape: f32[1,16], index: 6, kind: input, shape index: {}]
  %s7 = inlined_call_operand.vmem [shape: f32[16,8], index: 7, kind: input, shape index: {}]
  %s8 = inlined_call_operand.vmem [shape: f32[1,8], index: 8, kind: input, shape index: {}]
  %s9 = inlined_call_operand.hbm [shape: f32[2,16], index: 9, kind: output, shape index: {0}]
  %s10 = inlined_call_operand.hbm [shape: f32[2,8], index: 10, kind: output, shape index: {1}]
  %11 = xla_tuple %s9, %s10
  %s12 = sld [smem:[#allocation0]]
  $region54: #{tpu_custom_call.1} parent=0
    _
  %s14 = ssub.s32 1, %s12
  %s15 = scalar_select 0, %s14, %s12
  $region1: #{tpu_custom_call.1} parent=0
    #allocation2 [shape = 'u8[1024]{0}', space=vmem, size = 0x400, scoped, tag = 'output window, operand 0, single buffered']
    #allocation3 [shape = 's32[1]{0}', space=sflag, size = 0x4, scoped, tag = 'scoped memory for tpu_custom_call.1']
    #allocation4 [shape = 'u8[1024]{0}', space=vmem, size = 0x400, scoped, tag = 'output window, operand 1, single buffered']
    #allocation5 [shape = 's32[1]{0}', space=sflag, size = 0x4, scoped, tag = 'scoped memory for tpu_custom_call.1']
    %16 = vsyncpa [#allocation3], 0
    %17 = vsyncpa [#allocation5], 0
    // Predicated region
    $region2: #{tpu_custom_call.1} parent=1 // pred_check
      _
    $region3: #{tpu_custom_call.1} parent=1 // pred_check_branch
      %19 = sbr.rel (0) target = $region5
    $region4: #{tpu_custom_call.1} parent=1 // pred_region
      _
    $region5: #{tpu_custom_call.1} parent=1 // pred_fallthru
      _
    // Predicated region
    $region6: #{tpu_custom_call.1} parent=1 // pred_check
      _
    $region7: #{tpu_custom_call.1} parent=1 // pred_check_branch
      %21 = sbr.rel (0) target = $region9
    $region8: #{tpu_custom_call.1} parent=1 // pred_region
      _
    $region9: #{tpu_custom_call.1} parent=1 // pred_fallthru
      _
    // Predicated region
    $region10: #{tpu_custom_call.1} parent=1 // pred_check
      _
    $region11: #{tpu_custom_call.1} parent=1 // pred_check_branch
      %23 = sbr.rel (0) target = $region13
    $region12: #{tpu_custom_call.1} parent=1 // pred_region
      _
    $region13: #{tpu_custom_call.1} parent=1 // pred_fallthru
      _
    // Predicated region
    $region14: #{tpu_custom_call.1} parent=1 // pred_check
      _
    $region15: #{tpu_custom_call.1} parent=1 // pred_check_branch
      %25 = sbr.rel (0) target = $region17
    $region16: #{tpu_custom_call.1} parent=1 // pred_region
      _
    $region17: #{tpu_custom_call.1} parent=1 // pred_fallthru
      _
    // Predicated region
    $region18: #{tpu_custom_call.1} parent=1 // pred_check
      _
    $region19: #{tpu_custom_call.1} parent=1 // pred_check_branch
      %27 = sbr.rel (0) target = $region21
    $region20: #{tpu_custom_call.1} parent=1 // pred_region
      _
    $region21: #{tpu_custom_call.1} parent=1 // pred_fallthru
      _
    // Predicated region
    $region22: #{tpu_custom_call.1} parent=1 // pred_check
      _
    $region23: #{tpu_custom_call.1} parent=1 // pred_check_branch
      %29 = sbr.rel (0) target = $region25
    $region24: #{tpu_custom_call.1} parent=1 // pred_region
      _
    $region25: #{tpu_custom_call.1} parent=1 // pred_fallthru
      _
    // Predicated region
    $region26: #{tpu_custom_call.1} parent=1 // pred_check
      _
    $region27: #{tpu_custom_call.1} parent=1 // pred_check_branch
      %31 = sbr.rel (0) target = $region29
    $region28: #{tpu_custom_call.1} parent=1 // pred_region
      _
    $region29: #{tpu_custom_call.1} parent=1 // pred_fallthru
      _
    // Predicated region
    $region30: #{tpu_custom_call.1} parent=1 // pred_check
      _
    $region31: #{tpu_custom_call.1} parent=1 // pred_check_branch
      %33 = sbr.rel (0) target = $region33
    $region32: #{tpu_custom_call.1} parent=1 // pred_region
      _
    $region33: #{tpu_custom_call.1} parent=1 // pred_fallthru
      _
    // Predicated region
    $region34: #{tpu_custom_call.1} parent=1 // pred_check
      _
    $region35: #{tpu_custom_call.1} parent=1 // pred_check_branch
      %35 = sbr.rel (0) target = $region37
    $region36: #{tpu_custom_call.1} parent=1 // pred_region
      _
    $region37: #{tpu_custom_call.1} parent=1 // pred_fallthru
      _
    %v37 = vld [vmem:[%s0] sm:$0xff]
    %v38 = vld [vmem:[%s0 + $0x8] sm:$0xff]
    %41 = vst [vmem:[#allocation1] ss:$4 sm:$0xff] %v37
    %s42 = scalar_lea.vmem [#allocation1], 32
    %43 = vst [vmem:[%s42] ss:$4 sm:$0xff] %v38
    %v44 = vld.sshfl [vmem:[#allocation1] sm:$0xff pattern:$0x73625140]
    %v45 = vld.sshfl [vmem:[#allocation1 + $0x8] sm:$0xff pattern:$0x73625140]
    %v46 = vld.sshfl [vmem:[#allocation1 + $0x10] sm:$0xff pattern:$0x73625140]
    %v47 = vld.sshfl [vmem:[#allocation1 + $0x18] sm:$0xff pattern:$0x73625140]
    %v48 = vld.sshfl [vmem:[#allocation1 + $0x20] sm:$0xff pattern:$0x73625140]
    %v49 = vld.sshfl [vmem:[#allocation1 + $0x28] sm:$0xff pattern:$0x73625140]
    %v50 = vld.sshfl [vmem:[#allocation1 + $0x30] sm:$0xff pattern:$0x73625140]
    %v51 = vld.sshfl [vmem:[#allocation1 + $0x38] sm:$0xff pattern:$0x73625140]
    %v60 = vpack.c.bf16 %v44, %v44
    %v61 = vpack.c.bf16 %v45, %v45
    %v62 = vpack.c.bf16 %v46, %v46
    %v63 = vpack.c.bf16 %v47, %v47
    %v64 = vpack.c.bf16 %v48, %v48
    %v65 = vpack.c.bf16 %v49, %v49
    %v66 = vpack.c.bf16 %v50, %v50
    %v67 = vpack.c.bf16 %v51, %v51
    %v68 = vld [vmem:[%s3] sm:$0xf]
    %v69 = vld [vmem:[%s3 + $0x4] sm:$0xf]
    %v70 = vld [vmem:[%s3 + $0x8] sm:$0xf]
    %v71 = vld [vmem:[%s3 + $0xc] sm:$0xf]
    %v72 = vld [vmem:[%s3 + $0x10] sm:$0xf]
    %v73 = vld [vmem:[%s3 + $0x14] sm:$0xf]
    %v74 = vld [vmem:[%s3 + $0x18] sm:$0xf]
    %v75 = vld [vmem:[%s3 + $0x1c] sm:$0xf]
    %v76 = vld [vmem:[%s3 + $0x20] sm:$0xf]
    %v77 = vld [vmem:[%s3 + $0x24] sm:$0xf]
    %v78 = vld [vmem:[%s3 + $0x28] sm:$0xf]
    %v79 = vld [vmem:[%s3 + $0x2c] sm:$0xf]
    %v80 = vld [vmem:[%s3 + $0x30] sm:$0xf]
    %v81 = vld [vmem:[%s3 + $0x34] sm:$0xf]
    %v82 = vld [vmem:[%s3 + $0x38] sm:$0xf]
    %v83 = vld [vmem:[%s3 + $0x3c] sm:$0xf]
    %v84 = vld [vmem:[%s3 + $0x40] sm:$0xf]
    %v85 = vld [vmem:[%s3 + $0x44] sm:$0xf]
    %v86 = vld [vmem:[%s3 + $0x48] sm:$0xf]
    %v87 = vld [vmem:[%s3 + $0x4c] sm:$0xf]
    %v88 = vld [vmem:[%s3 + $0x50] sm:$0xf]
    %v89 = vld [vmem:[%s3 + $0x54] sm:$0xf]
    %v90 = vld [vmem:[%s3 + $0x58] sm:$0xf]
    %v91 = vld [vmem:[%s3 + $0x5c] sm:$0xf]
    %v92 = vld [vmem:[%s3 + $0x60] sm:$0xf]
    %v93 = vld [vmem:[%s3 + $0x64] sm:$0xf]
    %v94 = vld [vmem:[%s3 + $0x68] sm:$0xf]
    %v95 = vld [vmem:[%s3 + $0x6c] sm:$0xf]
    %v96 = vld [vmem:[%s3 + $0x70] sm:$0xf]
    %v97 = vld [vmem:[%s3 + $0x74] sm:$0xf]
    %v98 = vld [vmem:[%s3 + $0x78] sm:$0xf]
    %v99 = vld [vmem:[%s3 + $0x7c] sm:$0xf]
    %v100 = vld [vmem:[%s3 + $0x80] sm:$0xf]
    %v101 = vld [vmem:[%s3 + $0x84] sm:$0xf]
    %v102 = vld [vmem:[%s3 + $0x88] sm:$0xf]
    %v103 = vld [vmem:[%s3 + $0x8c] sm:$0xf]
    %v104 = vld [vmem:[%s3 + $0x90] sm:$0xf]
    %v105 = vld [vmem:[%s3 + $0x94] sm:$0xf]
    %v106 = vld [vmem:[%s3 + $0x98] sm:$0xf]
    %v107 = vld [vmem:[%s3 + $0x9c] sm:$0xf]
    %v108 = vld [vmem:[%s3 + $0xa0] sm:$0xf]
    %v109 = vld [vmem:[%s3 + $0xa4] sm:$0xf]
    %v110 = vld [vmem:[%s3 + $0xa8] sm:$0xf]
    %v111 = vld [vmem:[%s3 + $0xac] sm:$0xf]
    %v112 = vld [vmem:[%s3 + $0xb0] sm:$0xf]
    %v113 = vld [vmem:[%s3 + $0xb4] sm:$0xf]
    %v114 = vld [vmem:[%s3 + $0xb8] sm:$0xf]
    %v115 = vld [vmem:[%s3 + $0xbc] sm:$0xf]
    %v116 = vld [vmem:[%s3 + $0xc0] sm:$0xf]
    %v117 = vld [vmem:[%s3 + $0xc4] sm:$0xf]
    %v118 = vld [vmem:[%s3 + $0xc8] sm:$0xf]
    %v119 = vld [vmem:[%s3 + $0xcc] sm:$0xf]
    %v120 = vld [vmem:[%s3 + $0xd0] sm:$0xf]
    %v121 = vld [vmem:[%s3 + $0xd4] sm:$0xf]
    %v122 = vld [vmem:[%s3 + $0xd8] sm:$0xf]
    %v123 = vld [vmem:[%s3 + $0xdc] sm:$0xf]
    %v124 = vld [vmem:[%s3 + $0xe0] sm:$0xf]
    %v125 = vld [vmem:[%s3 + $0xe4] sm:$0xf]
    %v126 = vld [vmem:[%s3 + $0xe8] sm:$0xf]
    %v127 = vld [vmem:[%s3 + $0xec] sm:$0xf]
    %v128 = vld [vmem:[%s3 + $0xf0] sm:$0xf]
    %v129 = vld [vmem:[%s3 + $0xf4] sm:$0xf]
    %v130 = vld [vmem:[%s3 + $0xf8] sm:$0xf]
    %v131 = vld [vmem:[%s3 + $0xfc] sm:$0xf]
    %v132 = vld [vmem:[%s3 + $0x100] sm:$0xf]
    %v133 = vld [vmem:[%s3 + $0x104] sm:$0xf]
    %v134 = vld [vmem:[%s3 + $0x108] sm:$0xf]
    %v135 = vld [vmem:[%s3 + $0x10c] sm:$0xf]
    %v136 = vld [vmem:[%s3 + $0x110] sm:$0xf]
    %v137 = vld [vmem:[%s3 + $0x114] sm:$0xf]
    %v138 = vld [vmem:[%s3 + $0x118] sm:$0xf]
    %v139 = vld [vmem:[%s3 + $0x11c] sm:$0xf]
    %v140 = vld [vmem:[%s3 + $0x120] sm:$0xf]
    %v141 = vld [vmem:[%s3 + $0x124] sm:$0xf]
    %v142 = vld [vmem:[%s3 + $0x128] sm:$0xf]
    %v143 = vld [vmem:[%s3 + $0x12c] sm:$0xf]
    %v144 = vld [vmem:[%s3 + $0x130] sm:$0xf]
    %v145 = vld [vmem:[%s3 + $0x134] sm:$0xf]
    %v146 = vld [vmem:[%s3 + $0x138] sm:$0xf]
    %v147 = vld [vmem:[%s3 + $0x13c] sm:$0xf]
    %v148 = vld [vmem:[%s3 + $0x140] sm:$0xf]
    %v149 = vld [vmem:[%s3 + $0x144] sm:$0xf]
    %v150 = vld [vmem:[%s3 + $0x148] sm:$0xf]
    %v151 = vld [vmem:[%s3 + $0x14c] sm:$0xf]
    %v152 = vld [vmem:[%s3 + $0x150] sm:$0xf]
    %v153 = vld [vmem:[%s3 + $0x154] sm:$0xf]
    %v154 = vld [vmem:[%s3 + $0x158] sm:$0xf]
    %v155 = vld [vmem:[%s3 + $0x15c] sm:$0xf]
    %v156 = vld [vmem:[%s3 + $0x160] sm:$0xf]
    %v157 = vld [vmem:[%s3 + $0x164] sm:$0xf]
    %v158 = vld [vmem:[%s3 + $0x168] sm:$0xf]
    %v159 = vld [vmem:[%s3 + $0x16c] sm:$0xf]
    %v160 = vld [vmem:[%s3 + $0x170] sm:$0xf]
    %v161 = vld [vmem:[%s3 + $0x174] sm:$0xf]
    %v162 = vld [vmem:[%s3 + $0x178] sm:$0xf]
    %v163 = vld [vmem:[%s3 + $0x17c] sm:$0xf]
    %v164 = vld [vmem:[%s3 + $0x180] sm:$0xf]
    %v165 = vld [vmem:[%s3 + $0x184] sm:$0xf]
    %v166 = vld [vmem:[%s3 + $0x188] sm:$0xf]
    %v167 = vld [vmem:[%s3 + $0x18c] sm:$0xf]
    %v168 = vld [vmem:[%s3 + $0x190] sm:$0xf]
    %v169 = vld [vmem:[%s3 + $0x194] sm:$0xf]
    %v170 = vld [vmem:[%s3 + $0x198] sm:$0xf]
    %v171 = vld [vmem:[%s3 + $0x19c] sm:$0xf]
    %v172 = vld [vmem:[%s3 + $0x1a0] sm:$0xf]
    %v173 = vld [vmem:[%s3 + $0x1a4] sm:$0xf]
    %v174 = vld [vmem:[%s3 + $0x1a8] sm:$0xf]
    %v175 = vld [vmem:[%s3 + $0x1ac] sm:$0xf]
    %v176 = vld [vmem:[%s3 + $0x1b0] sm:$0xf]
    %v177 = vld [vmem:[%s3 + $0x1b4] sm:$0xf]
    %v178 = vld [vmem:[%s3 + $0x1b8] sm:$0xf]
    %v179 = vld [vmem:[%s3 + $0x1bc] sm:$0xf]
    %v180 = vld [vmem:[%s3 + $0x1c0] sm:$0xf]
    %v181 = vld [vmem:[%s3 + $0x1c4] sm:$0xf]
    %v182 = vld [vmem:[%s3 + $0x1c8] sm:$0xf]
    %v183 = vld [vmem:[%s3 + $0x1cc] sm:$0xf]
    %v184 = vld [vmem:[%s3 + $0x1d0] sm:$0xf]
    %v185 = vld [vmem:[%s3 + $0x1d4] sm:$0xf]
    %v186 = vld [vmem:[%s3 + $0x1d8] sm:$0xf]
    %v187 = vld [vmem:[%s3 + $0x1dc] sm:$0xf]
    %v188 = vld [vmem:[%s3 + $0x1e0] sm:$0xf]
    %v189 = vld [vmem:[%s3 + $0x1e4] sm:$0xf]
    %v190 = vld [vmem:[%s3 + $0x1e8] sm:$0xf]
    %v191 = vld [vmem:[%s3 + $0x1ec] sm:$0xf]
    %v192 = vld [vmem:[%s3 + $0x1f0] sm:$0xf]
    %v193 = vld [vmem:[%s3 + $0x1f4] sm:$0xf]
    %v194 = vld [vmem:[%s3 + $0x1f8] sm:$0xf]
    %v195 = vld [vmem:[%s3 + $0x1fc] sm:$0xf]
    %v196 = vld [vmem:[%s1] sm:$0xff]
    %v197 = vld [vmem:[%s1 + $0x8] sm:$0xff]
    %200 = vst [vmem:[#allocation1] ss:$4 sm:$0xff] %v196
    %s201 = scalar_lea.vmem [#allocation1], 32
    %202 = vst [vmem:[%s201] ss:$4 sm:$0xff] %v197
    %v203 = vld.sshfl [vmem:[#allocation1] sm:$0xff pattern:$0x73625140]
    %v204 = vld.sshfl [vmem:[#allocation1 + $0x8] sm:$0xff pattern:$0x73625140]
    %v205 = vld.sshfl [vmem:[#allocation1 + $0x10] sm:$0xff pattern:$0x73625140]
    %v206 = vld.sshfl [vmem:[#allocation1 + $0x18] sm:$0xff pattern:$0x73625140]
    %v207 = vld.sshfl [vmem:[#allocation1 + $0x20] sm:$0xff pattern:$0x73625140]
    %v208 = vld.sshfl [vmem:[#allocation1 + $0x28] sm:$0xff pattern:$0x73625140]
    %v209 = vld.sshfl [vmem:[#allocation1 + $0x30] sm:$0xff pattern:$0x73625140]
    %v210 = vld.sshfl [vmem:[#allocation1 + $0x38] sm:$0xff pattern:$0x73625140]
    %v219 = vpack.c.bf16 %v203, %v203
    %v220 = vpack.c.bf16 %v204, %v204
    %v221 = vpack.c.bf16 %v205, %v205
    %v222 = vpack.c.bf16 %v206, %v206
    %v223 = vpack.c.bf16 %v207, %v207
    %v224 = vpack.c.bf16 %v208, %v208
    %v225 = vpack.c.bf16 %v209, %v209
    %v226 = vpack.c.bf16 %v210, %v210
    %v227 = vld [vmem:[%s4] sm:$0xf]
    %v228 = vld [vmem:[%s4 + $0x4] sm:$0xf]
    %v229 = vld [vmem:[%s4 + $0x8] sm:$0xf]
    %v230 = vld [vmem:[%s4 + $0xc] sm:$0xf]
    %v231 = vld [vmem:[%s4 + $0x10] sm:$0xf]
    %v232 = vld [vmem:[%s4 + $0x14] sm:$0xf]
    %v233 = vld [vmem:[%s4 + $0x18] sm:$0xf]
    %v234 = vld [vmem:[%s4 + $0x1c] sm:$0xf]
    %v235 = vld [vmem:[%s4 + $0x20] sm:$0xf]
    %v236 = vld [vmem:[%s4 + $0x24] sm:$0xf]
    %v237 = vld [vmem:[%s4 + $0x28] sm:$0xf]
    %v238 = vld [vmem:[%s4 + $0x2c] sm:$0xf]
    %v239 = vld [vmem:[%s4 + $0x30] sm:$0xf]
    %v240 = vld [vmem:[%s4 + $0x34] sm:$0xf]
    %v241 = vld [vmem:[%s4 + $0x38] sm:$0xf]
    %v242 = vld [vmem:[%s4 + $0x3c] sm:$0xf]
    %v243 = vld [vmem:[%s4 + $0x40] sm:$0xf]
    %v244 = vld [vmem:[%s4 + $0x44] sm:$0xf]
    %v245 = vld [vmem:[%s4 + $0x48] sm:$0xf]
    %v246 = vld [vmem:[%s4 + $0x4c] sm:$0xf]
    %v247 = vld [vmem:[%s4 + $0x50] sm:$0xf]
    %v248 = vld [vmem:[%s4 + $0x54] sm:$0xf]
    %v249 = vld [vmem:[%s4 + $0x58] sm:$0xf]
    %v250 = vld [vmem:[%s4 + $0x5c] sm:$0xf]
    %v251 = vld [vmem:[%s4 + $0x60] sm:$0xf]
    %v252 = vld [vmem:[%s4 + $0x64] sm:$0xf]
    %v253 = vld [vmem:[%s4 + $0x68] sm:$0xf]
    %v254 = vld [vmem:[%s4 + $0x6c] sm:$0xf]
    %v255 = vld [vmem:[%s4 + $0x70] sm:$0xf]
    %v256 = vld [vmem:[%s4 + $0x74] sm:$0xf]
    %v257 = vld [vmem:[%s4 + $0x78] sm:$0xf]
    %v258 = vld [vmem:[%s4 + $0x7c] sm:$0xf]
    %v259 = vld [vmem:[%s4 + $0x80] sm:$0xf]
    %v260 = vld [vmem:[%s4 + $0x84] sm:$0xf]
    %v261 = vld [vmem:[%s4 + $0x88] sm:$0xf]
    %v262 = vld [vmem:[%s4 + $0x8c] sm:$0xf]
    %v263 = vld [vmem:[%s4 + $0x90] sm:$0xf]
    %v264 = vld [vmem:[%s4 + $0x94] sm:$0xf]
    %v265 = vld [vmem:[%s4 + $0x98] sm:$0xf]
    %v266 = vld [vmem:[%s4 + $0x9c] sm:$0xf]
    %v267 = vld [vmem:[%s4 + $0xa0] sm:$0xf]
    %v268 = vld [vmem:[%s4 + $0xa4] sm:$0xf]
    %v269 = vld [vmem:[%s4 + $0xa8] sm:$0xf]
    %v270 = vld [vmem:[%s4 + $0xac] sm:$0xf]
    %v271 = vld [vmem:[%s4 + $0xb0] sm:$0xf]
    %v272 = vld [vmem:[%s4 + $0xb4] sm:$0xf]
    %v273 = vld [vmem:[%s4 + $0xb8] sm:$0xf]
    %v274 = vld [vmem:[%s4 + $0xbc] sm:$0xf]
    %v275 = vld [vmem:[%s4 + $0xc0] sm:$0xf]
    %v276 = vld [vmem:[%s4 + $0xc4] sm:$0xf]
    %v277 = vld [vmem:[%s4 + $0xc8] sm:$0xf]
    %v278 = vld [vmem:[%s4 + $0xcc] sm:$0xf]
    %v279 = vld [vmem:[%s4 + $0xd0] sm:$0xf]
    %v280 = vld [vmem:[%s4 + $0xd4] sm:$0xf]
    %v281 = vld [vmem:[%s4 + $0xd8] sm:$0xf]
    %v282 = vld [vmem:[%s4 + $0xdc] sm:$0xf]
    %v283 = vld [vmem:[%s4 + $0xe0] sm:$0xf]
    %v284 = vld [vmem:[%s4 + $0xe4] sm:$0xf]
    %v285 = vld [vmem:[%s4 + $0xe8] sm:$0xf]
    %v286 = vld [vmem:[%s4 + $0xec] sm:$0xf]
    %v287 = vld [vmem:[%s4 + $0xf0] sm:$0xf]
    %v288 = vld [vmem:[%s4 + $0xf4] sm:$0xf]
    %v289 = vld [vmem:[%s4 + $0xf8] sm:$0xf]
    %v290 = vld [vmem:[%s4 + $0xfc] sm:$0xf]
    %v291 = vld [vmem:[%s4 + $0x100] sm:$0xf]
    %v292 = vld [vmem:[%s4 + $0x104] sm:$0xf]
    %v293 = vld [vmem:[%s4 + $0x108] sm:$0xf]
    %v294 = vld [vmem:[%s4 + $0x10c] sm:$0xf]
    %v295 = vld [vmem:[%s4 + $0x110] sm:$0xf]
    %v296 = vld [vmem:[%s4 + $0x114] sm:$0xf]
    %v297 = vld [vmem:[%s4 + $0x118] sm:$0xf]
    %v298 = vld [vmem:[%s4 + $0x11c] sm:$0xf]
    %v299 = vld [vmem:[%s4 + $0x120] sm:$0xf]
    %v300 = vld [vmem:[%s4 + $0x124] sm:$0xf]
    %v301 = vld [vmem:[%s4 + $0x128] sm:$0xf]
    %v302 = vld [vmem:[%s4 + $0x12c] sm:$0xf]
    %v303 = vld [vmem:[%s4 + $0x130] sm:$0xf]
    %v304 = vld [vmem:[%s4 + $0x134] sm:$0xf]
    %v305 = vld [vmem:[%s4 + $0x138] sm:$0xf]
    %v306 = vld [vmem:[%s4 + $0x13c] sm:$0xf]
    %v307 = vld [vmem:[%s4 + $0x140] sm:$0xf]
    %v308 = vld [vmem:[%s4 + $0x144] sm:$0xf]
    %v309 = vld [vmem:[%s4 + $0x148] sm:$0xf]
    %v310 = vld [vmem:[%s4 + $0x14c] sm:$0xf]
    %v311 = vld [vmem:[%s4 + $0x150] sm:$0xf]
    %v312 = vld [vmem:[%s4 + $0x154] sm:$0xf]
    %v313 = vld [vmem:[%s4 + $0x158] sm:$0xf]
    %v314 = vld [vmem:[%s4 + $0x15c] sm:$0xf]
    %v315 = vld [vmem:[%s4 + $0x160] sm:$0xf]
    %v316 = vld [vmem:[%s4 + $0x164] sm:$0xf]
    %v317 = vld [vmem:[%s4 + $0x168] sm:$0xf]
    %v318 = vld [vmem:[%s4 + $0x16c] sm:$0xf]
    %v319 = vld [vmem:[%s4 + $0x170] sm:$0xf]
    %v320 = vld [vmem:[%s4 + $0x174] sm:$0xf]
    %v321 = vld [vmem:[%s4 + $0x178] sm:$0xf]
    %v322 = vld [vmem:[%s4 + $0x17c] sm:$0xf]
    %v323 = vld [vmem:[%s4 + $0x180] sm:$0xf]
    %v324 = vld [vmem:[%s4 + $0x184] sm:$0xf]
    %v325 = vld [vmem:[%s4 + $0x188] sm:$0xf]
    %v326 = vld [vmem:[%s4 + $0x18c] sm:$0xf]
    %v327 = vld [vmem:[%s4 + $0x190] sm:$0xf]
    %v328 = vld [vmem:[%s4 + $0x194] sm:$0xf]
    %v329 = vld [vmem:[%s4 + $0x198] sm:$0xf]
    %v330 = vld [vmem:[%s4 + $0x19c] sm:$0xf]
    %v331 = vld [vmem:[%s4 + $0x1a0] sm:$0xf]
    %v332 = vld [vmem:[%s4 + $0x1a4] sm:$0xf]
    %v333 = vld [vmem:[%s4 + $0x1a8] sm:$0xf]
    %v334 = vld [vmem:[%s4 + $0x1ac] sm:$0xf]
    %v335 = vld [vmem:[%s4 + $0x1b0] sm:$0xf]
    %v336 = vld [vmem:[%s4 + $0x1b4] sm:$0xf]
    %v337 = vld [vmem:[%s4 + $0x1b8] sm:$0xf]
    %v338 = vld [vmem:[%s4 + $0x1bc] sm:$0xf]
    %v339 = vld [vmem:[%s4 + $0x1c0] sm:$0xf]
    %v340 = vld [vmem:[%s4 + $0x1c4] sm:$0xf]
    %v341 = vld [vmem:[%s4 + $0x1c8] sm:$0xf]
    %v342 = vld [vmem:[%s4 + $0x1cc] sm:$0xf]
    %v343 = vld [vmem:[%s4 + $0x1d0] sm:$0xf]
    %v344 = vld [vmem:[%s4 + $0x1d4] sm:$0xf]
    %v345 = vld [vmem:[%s4 + $0x1d8] sm:$0xf]
    %v346 = vld [vmem:[%s4 + $0x1dc] sm:$0xf]
    %v347 = vld [vmem:[%s4 + $0x1e0] sm:$0xf]
    %v348 = vld [vmem:[%s4 + $0x1e4] sm:$0xf]
    %v349 = vld [vmem:[%s4 + $0x1e8] sm:$0xf]
    %v350 = vld [vmem:[%s4 + $0x1ec] sm:$0xf]
    %v351 = vld [vmem:[%s4 + $0x1f0] sm:$0xf]
    %v352 = vld [vmem:[%s4 + $0x1f4] sm:$0xf]
    %v353 = vld [vmem:[%s4 + $0x1f8] sm:$0xf]
    %v354 = vld [vmem:[%s4 + $0x1fc] sm:$0xf]
    %v483 = vunpack.c.l.b16 %v227
    %v484 = vunpack.c.l.b16 %v228
    %v485 = vunpack.c.l.b16 %v229
    %v486 = vunpack.c.l.b16 %v230
    %v487 = vunpack.c.l.b16 %v231
    %v488 = vunpack.c.l.b16 %v232
    %v489 = vunpack.c.l.b16 %v233
    %v490 = vunpack.c.l.b16 %v234
    %v491 = vunpack.c.l.b16 %v235
    %v492 = vunpack.c.l.b16 %v236
    %v493 = vunpack.c.l.b16 %v237
    %v494 = vunpack.c.l.b16 %v238
    %v495 = vunpack.c.l.b16 %v239
    %v496 = vunpack.c.l.b16 %v240
    %v497 = vunpack.c.l.b16 %v241
    %v498 = vunpack.c.l.b16 %v242
    %v499 = vunpack.c.l.b16 %v243
    %v500 = vunpack.c.l.b16 %v244
    %v501 = vunpack.c.l.b16 %v245
    %v502 = vunpack.c.l.b16 %v246
    %v503 = vunpack.c.l.b16 %v247
    %v504 = vunpack.c.l.b16 %v248
    %v505 = vunpack.c.l.b16 %v249
    %v506 = vunpack.c.l.b16 %v250
    %v507 = vunpack.c.l.b16 %v251
    %v508 = vunpack.c.l.b16 %v252
    %v509 = vunpack.c.l.b16 %v253
    %v510 = vunpack.c.l.b16 %v254
    %v511 = vunpack.c.l.b16 %v255
    %v512 = vunpack.c.l.b16 %v256
    %v513 = vunpack.c.l.b16 %v257
    %v514 = vunpack.c.l.b16 %v258
    %v515 = vunpack.c.l.b16 %v259
    %v516 = vunpack.c.l.b16 %v260
    %v517 = vunpack.c.l.b16 %v261
    %v518 = vunpack.c.l.b16 %v262
    %v519 = vunpack.c.l.b16 %v263
    %v520 = vunpack.c.l.b16 %v264
    %v521 = vunpack.c.l.b16 %v265
    %v522 = vunpack.c.l.b16 %v266
    %v523 = vunpack.c.l.b16 %v267
    %v524 = vunpack.c.l.b16 %v268
    %v525 = vunpack.c.l.b16 %v269
    %v526 = vunpack.c.l.b16 %v270
    %v527 = vunpack.c.l.b16 %v271
    %v528 = vunpack.c.l.b16 %v272
    %v529 = vunpack.c.l.b16 %v273
    %v530 = vunpack.c.l.b16 %v274
    %v531 = vunpack.c.l.b16 %v275
    %v532 = vunpack.c.l.b16 %v276
    %v533 = vunpack.c.l.b16 %v277
    %v534 = vunpack.c.l.b16 %v278
    %v535 = vunpack.c.l.b16 %v279
    %v536 = vunpack.c.l.b16 %v280
    %v537 = vunpack.c.l.b16 %v281
    %v538 = vunpack.c.l.b16 %v282
    %v539 = vunpack.c.l.b16 %v283
    %v540 = vunpack.c.l.b16 %v284
    %v541 = vunpack.c.l.b16 %v285
    %v542 = vunpack.c.l.b16 %v286
    %v543 = vunpack.c.l.b16 %v287
    %v544 = vunpack.c.l.b16 %v288
    %v545 = vunpack.c.l.b16 %v289
    %v546 = vunpack.c.l.b16 %v290
    %v547 = vunpack.c.l.b16 %v291
    %v548 = vunpack.c.l.b16 %v292
    %v549 = vunpack.c.l.b16 %v293
    %v550 = vunpack.c.l.b16 %v294
    %v551 = vunpack.c.l.b16 %v295
    %v552 = vunpack.c.l.b16 %v296
    %v553 = vunpack.c.l.b16 %v297
    %v554 = vunpack.c.l.b16 %v298
    %v555 = vunpack.c.l.b16 %v299
    %v556 = vunpack.c.l.b16 %v300
    %v557 = vunpack.c.l.b16 %v301
    %v558 = vunpack.c.l.b16 %v302
    %v559 = vunpack.c.l.b16 %v303
    %v560 = vunpack.c.l.b16 %v304
    %v561 = vunpack.c.l.b16 %v305
    %v562 = vunpack.c.l.b16 %v306
    %v563 = vunpack.c.l.b16 %v307
    %v564 = vunpack.c.l.b16 %v308
    %v565 = vunpack.c.l.b16 %v309
    %v566 = vunpack.c.l.b16 %v310
    %v567 = vunpack.c.l.b16 %v311
    %v568 = vunpack.c.l.b16 %v312
    %v569 = vunpack.c.l.b16 %v313
    %v570 = vunpack.c.l.b16 %v314
    %v571 = vunpack.c.l.b16 %v315
    %v572 = vunpack.c.l.b16 %v316
    %v573 = vunpack.c.l.b16 %v317
    %v574 = vunpack.c.l.b16 %v318
    %v575 = vunpack.c.l.b16 %v319
    %v576 = vunpack.c.l.b16 %v320
    %v577 = vunpack.c.l.b16 %v321
    %v578 = vunpack.c.l.b16 %v322
    %v579 = vunpack.c.l.b16 %v323
    %v580 = vunpack.c.l.b16 %v324
    %v581 = vunpack.c.l.b16 %v325
    %v582 = vunpack.c.l.b16 %v326
    %v583 = vunpack.c.l.b16 %v327
    %v584 = vunpack.c.l.b16 %v328
    %v585 = vunpack.c.l.b16 %v329
    %v586 = vunpack.c.l.b16 %v330
    %v587 = vunpack.c.l.b16 %v331
    %v588 = vunpack.c.l.b16 %v332
    %v589 = vunpack.c.l.b16 %v333
    %v590 = vunpack.c.l.b16 %v334
    %v591 = vunpack.c.l.b16 %v335
    %v592 = vunpack.c.l.b16 %v336
    %v593 = vunpack.c.l.b16 %v337
    %v594 = vunpack.c.l.b16 %v338
    %v595 = vunpack.c.l.b16 %v339
    %v596 = vunpack.c.l.b16 %v340
    %v597 = vunpack.c.l.b16 %v341
    %v598 = vunpack.c.l.b16 %v342
    %v599 = vunpack.c.l.b16 %v343
    %v600 = vunpack.c.l.b16 %v344
    %v601 = vunpack.c.l.b16 %v345
    %v602 = vunpack.c.l.b16 %v346
    %v603 = vunpack.c.l.b16 %v347
    %v604 = vunpack.c.l.b16 %v348
    %v605 = vunpack.c.l.b16 %v349
    %v606 = vunpack.c.l.b16 %v350
    %v607 = vunpack.c.l.b16 %v351
    %v608 = vunpack.c.l.b16 %v352
    %v609 = vunpack.c.l.b16 %v353
    %v610 = vunpack.c.l.b16 %v354
    %v611 = vpack.c.b16 %v484, %v483
    %v612 = vpack.c.b16 %v486, %v485
    %v613 = vpack.c.b16 %v488, %v487
    %v614 = vpack.c.b16 %v490, %v489
    %v615 = vpack.c.b16 %v492, %v491
    %v616 = vpack.c.b16 %v494, %v493
    %v617 = vpack.c.b16 %v496, %v495
    %v618 = vpack.c.b16 %v498, %v497
    %v619 = vpack.c.b16 %v500, %v499
    %v620 = vpack.c.b16 %v502, %v501
    %v621 = vpack.c.b16 %v504, %v503
    %v622 = vpack.c.b16 %v506, %v505
    %v623 = vpack.c.b16 %v508, %v507
    %v624 = vpack.c.b16 %v510, %v509
    %v625 = vpack.c.b16 %v512, %v511
    %v626 = vpack.c.b16 %v514, %v513
    %v627 = vpack.c.b16 %v516, %v515
    %v628 = vpack.c.b16 %v518, %v517
    %v629 = vpack.c.b16 %v520, %v519
    %v630 = vpack.c.b16 %v522, %v521
    %v631 = vpack.c.b16 %v524, %v523
    %v632 = vpack.c.b16 %v526, %v525
    %v633 = vpack.c.b16 %v528, %v527
    %v634 = vpack.c.b16 %v530, %v529
    %v635 = vpack.c.b16 %v532, %v531
    %v636 = vpack.c.b16 %v534, %v533
    %v637 = vpack.c.b16 %v536, %v535
    %v638 = vpack.c.b16 %v538, %v537
    %v639 = vpack.c.b16 %v540, %v539
    %v640 = vpack.c.b16 %v542, %v541
    %v641 = vpack.c.b16 %v544, %v543
    %v642 = vpack.c.b16 %v546, %v545
    %v643 = vpack.c.b16 %v548, %v547
    %v644 = vpack.c.b16 %v550, %v549
    %v645 = vpack.c.b16 %v552, %v551
    %v646 = vpack.c.b16 %v554, %v553
    %v647 = vpack.c.b16 %v556, %v555
    %v648 = vpack.c.b16 %v558, %v557
    %v649 = vpack.c.b16 %v560, %v559
    %v650 = vpack.c.b16 %v562, %v561
    %v651 = vpack.c.b16 %v564, %v563
    %v652 = vpack.c.b16 %v566, %v565
    %v653 = vpack.c.b16 %v568, %v567
    %v654 = vpack.c.b16 %v570, %v569
    %v655 = vpack.c.b16 %v572, %v571
    %v656 = vpack.c.b16 %v574, %v573
    %v657 = vpack.c.b16 %v576, %v575
    %v658 = vpack.c.b16 %v578, %v577
    %v659 = vpack.c.b16 %v580, %v579
    %v660 = vpack.c.b16 %v582, %v581
    %v661 = vpack.c.b16 %v584, %v583
    %v662 = vpack.c.b16 %v586, %v585
    %v663 = vpack.c.b16 %v588, %v587
    %v664 = vpack.c.b16 %v590, %v589
    %v665 = vpack.c.b16 %v592, %v591
    %v666 = vpack.c.b16 %v594, %v593
    %v667 = vpack.c.b16 %v596, %v595
    %v668 = vpack.c.b16 %v598, %v597
    %v669 = vpack.c.b16 %v600, %v599
    %v670 = vpack.c.b16 %v602, %v601
    %v671 = vpack.c.b16 %v604, %v603
    %v672 = vpack.c.b16 %v606, %v605
    %v673 = vpack.c.b16 %v608, %v607
    %v674 = vpack.c.b16 %v610, %v609
    %739 = vmatpush.bf16.msra.mxu0 %v618
    %740 = vmatpush.bf16.msra.mxu0 %v617
    %741 = vmatpush.bf16.msra.mxu0 %v616
    %742 = vmatpush.bf16.msra.mxu0 %v615
    %743 = vmatpush.bf16.msra.mxu0 %v614
    %744 = vmatpush.bf16.msra.mxu0 %v613
    %745 = vmatpush.bf16.msra.mxu0 %v612
    %746 = vmatpush.bf16.msra.mxu0 %v611
    %747 = vmatmul.bf16.gmra.mxu0 %v219
    %v748 = vpop.f32.mrf.mxu0
    %v749 = vadd.f32 0.0, %v748
    %v750 = vpop.f32.mrf.mxu0
    %751 = vdwg.mxu0
    %752 = vmatpush.bf16.msra.mxu0 %v626
    %753 = vmatpush.bf16.msra.mxu0 %v625
    %754 = vmatpush.bf16.msra.mxu0 %v624
    %755 = vmatpush.bf16.msra.mxu0 %v623
    %756 = vmatpush.bf16.msra.mxu0 %v622
    %757 = vmatpush.bf16.msra.mxu0 %v621
    %758 = vmatpush.bf16.msra.mxu0 %v620
    %759 = vmatpush.bf16.msra.mxu0 %v619
    %760 = vmatmul.bf16.gmra.mxu0 %v220
    %v761 = vpop.f32.mrf.mxu0
    %v762 = vadd.f32 %v749, %v761
    %v763 = vpop.f32.mrf.mxu0
    %764 = vdwg.mxu0
    %765 = vmatpush.bf16.msra.mxu0 %v634
    %766 = vmatpush.bf16.msra.mxu0 %v633
    %767 = vmatpush.bf16.msra.mxu0 %v632
    %768 = vmatpush.bf16.msra.mxu0 %v631
    %769 = vmatpush.bf16.msra.mxu0 %v630
    %770 = vmatpush.bf16.msra.mxu0 %v629
    %771 = vmatpush.bf16.msra.mxu0 %v628
    %772 = vmatpush.bf16.msra.mxu0 %v627
    %773 = vmatmul.bf16.gmra.mxu0 %v221
    %v774 = vpop.f32.mrf.mxu0
    %v775 = vadd.f32 %v762, %v774
    %v776 = vpop.f32.mrf.mxu0
    %777 = vdwg.mxu0
    %778 = vmatpush.bf16.msra.mxu0 %v642
    %779 = vmatpush.bf16.msra.mxu0 %v641
    %780 = vmatpush.bf16.msra.mxu0 %v640
    %781 = vmatpush.bf16.msra.mxu0 %v639
    %782 = vmatpush.bf16.msra.mxu0 %v638
    %783 = vmatpush.bf16.msra.mxu0 %v637
    %784 = vmatpush.bf16.msra.mxu0 %v636
    %785 = vmatpush.bf16.msra.mxu0 %v635
    %786 = vmatmul.bf16.gmra.mxu0 %v222
    %v787 = vpop.f32.mrf.mxu0
    %v788 = vadd.f32 %v775, %v787
    %v789 = vpop.f32.mrf.mxu0
    %790 = vdwg.mxu0
    %791 = vmatpush.bf16.msra.mxu0 %v650
    %792 = vmatpush.bf16.msra.mxu0 %v649
    %793 = vmatpush.bf16.msra.mxu0 %v648
    %794 = vmatpush.bf16.msra.mxu0 %v647
    %795 = vmatpush.bf16.msra.mxu0 %v646
    %796 = vmatpush.bf16.msra.mxu0 %v645
    %797 = vmatpush.bf16.msra.mxu0 %v644
    %798 = vmatpush.bf16.msra.mxu0 %v643
    %799 = vmatmul.bf16.gmra.mxu0 %v223
    %v800 = vpop.f32.mrf.mxu0
    %v801 = vadd.f32 %v788, %v800
    %v802 = vpop.f32.mrf.mxu0
    %803 = vdwg.mxu0
    %804 = vmatpush.bf16.msra.mxu0 %v658
    %805 = vmatpush.bf16.msra.mxu0 %v657
    %806 = vmatpush.bf16.msra.mxu0 %v656
    %807 = vmatpush.bf16.msra.mxu0 %v655
    %808 = vmatpush.bf16.msra.mxu0 %v654
    %809 = vmatpush.bf16.msra.mxu0 %v653
    %810 = vmatpush.bf16.msra.mxu0 %v652
    %811 = vmatpush.bf16.msra.mxu0 %v651
    %812 = vmatmul.bf16.gmra.mxu0 %v224
    %v813 = vpop.f32.mrf.mxu0
    %v814 = vadd.f32 %v801, %v813
    %v815 = vpop.f32.mrf.mxu0
    %816 = vdwg.mxu0
    %817 = vmatpush.bf16.msra.mxu0 %v666
    %818 = vmatpush.bf16.msra.mxu0 %v665
    %819 = vmatpush.bf16.msra.mxu0 %v664
    %820 = vmatpush.bf16.msra.mxu0 %v663
    %821 = vmatpush.bf16.msra.mxu0 %v662
    %822 = vmatpush.bf16.msra.mxu0 %v661
    %823 = vmatpush.bf16.msra.mxu0 %v660
    %824 = vmatpush.bf16.msra.mxu0 %v659
    %825 = vmatmul.bf16.gmra.mxu0 %v225
    %v826 = vpop.f32.mrf.mxu0
    %v827 = vadd.f32 %v814, %v826
    %v828 = vpop.f32.mrf.mxu0
    %829 = vdwg.mxu0
    %830 = vmatpush.bf16.msra.mxu0 %v674
    %831 = vmatpush.bf16.msra.mxu0 %v673
    %832 = vmatpush.bf16.msra.mxu0 %v672
    %833 = vmatpush.bf16.msra.mxu0 %v671
    %834 = vmatpush.bf16.msra.mxu0 %v670
    %835 = vmatpush.bf16.msra.mxu0 %v669
    %836 = vmatpush.bf16.msra.mxu0 %v668
    %837 = vmatpush.bf16.msra.mxu0 %v667
    %838 = vmatmul.bf16.gmra.mxu0 %v226
    %v839 = vpop.f32.mrf.mxu0
    %v840 = vadd.f32 %v827, %v839
    %v841 = vpop.f32.mrf.mxu0
    %842 = vdwg.mxu0
    %v971 = vunpack.c.l.b16 %v68
    %v972 = vunpack.c.l.b16 %v69
    %v973 = vunpack.c.l.b16 %v70
    %v974 = vunpack.c.l.b16 %v71
    %v975 = vunpack.c.l.b16 %v72
    %v976 = vunpack.c.l.b16 %v73
    %v977 = vunpack.c.l.b16 %v74
    %v978 = vunpack.c.l.b16 %v75
    %v979 = vunpack.c.l.b16 %v76
    %v980 = vunpack.c.l.b16 %v77
    %v981 = vunpack.c.l.b16 %v78
    %v982 = vunpack.c.l.b16 %v79
    %v983 = vunpack.c.l.b16 %v80
    %v984 = vunpack.c.l.b16 %v81
    %v985 = vunpack.c.l.b16 %v82
    %v986 = vunpack.c.l.b16 %v83
    %v987 = vunpack.c.l.b16 %v84
    %v988 = vunpack.c.l.b16 %v85
    %v989 = vunpack.c.l.b16 %v86
    %v990 = vunpack.c.l.b16 %v87
    %v991 = vunpack.c.l.b16 %v88
    %v992 = vunpack.c.l.b16 %v89
    %v993 = vunpack.c.l.b16 %v90
    %v994 = vunpack.c.l.b16 %v91
    %v995 = vunpack.c.l.b16 %v92
    %v996 = vunpack.c.l.b16 %v93
    %v997 = vunpack.c.l.b16 %v94
    %v998 = vunpack.c.l.b16 %v95
    %v999 = vunpack.c.l.b16 %v96
    %v1000 = vunpack.c.l.b16 %v97
    %v1001 = vunpack.c.l.b16 %v98
    %v1002 = vunpack.c.l.b16 %v99
    %v1003 = vunpack.c.l.b16 %v100
    %v1004 = vunpack.c.l.b16 %v101
    %v1005 = vunpack.c.l.b16 %v102
    %v1006 = vunpack.c.l.b16 %v103
    %v1007 = vunpack.c.l.b16 %v104
    %v1008 = vunpack.c.l.b16 %v105
    %v1009 = vunpack.c.l.b16 %v106
    %v1010 = vunpack.c.l.b16 %v107
    %v1011 = vunpack.c.l.b16 %v108
    %v1012 = vunpack.c.l.b16 %v109
    %v1013 = vunpack.c.l.b16 %v110
    %v1014 = vunpack.c.l.b16 %v111
    %v1015 = vunpack.c.l.b16 %v112
    %v1016 = vunpack.c.l.b16 %v113
    %v1017 = vunpack.c.l.b16 %v114
    %v1018 = vunpack.c.l.b16 %v115
    %v1019 = vunpack.c.l.b16 %v116
    %v1020 = vunpack.c.l.b16 %v117
    %v1021 = vunpack.c.l.b16 %v118
    %v1022 = vunpack.c.l.b16 %v119
    %v1023 = vunpack.c.l.b16 %v120
    %v1024 = vunpack.c.l.b16 %v121
    %v1025 = vunpack.c.l.b16 %v122
    %v1026 = vunpack.c.l.b16 %v123
    %v1027 = vunpack.c.l.b16 %v124
    %v1028 = vunpack.c.l.b16 %v125
    %v1029 = vunpack.c.l.b16 %v126
    %v1030 = vunpack.c.l.b16 %v127
    %v1031 = vunpack.c.l.b16 %v128
    %v1032 = vunpack.c.l.b16 %v129
    %v1033 = vunpack.c.l.b16 %v130
    %v1034 = vunpack.c.l.b16 %v131
    %v1035 = vunpack.c.l.b16 %v132
    %v1036 = vunpack.c.l.b16 %v133
    %v1037 = vunpack.c.l.b16 %v134
    %v1038 = vunpack.c.l.b16 %v135
    %v1039 = vunpack.c.l.b16 %v136
    %v1040 = vunpack.c.l.b16 %v137
    %v1041 = vunpack.c.l.b16 %v138
    %v1042 = vunpack.c.l.b16 %v139
    %v1043 = vunpack.c.l.b16 %v140
    %v1044 = vunpack.c.l.b16 %v141
    %v1045 = vunpack.c.l.b16 %v142
    %v1046 = vunpack.c.l.b16 %v143
    %v1047 = vunpack.c.l.b16 %v144
    %v1048 = vunpack.c.l.b16 %v145
    %v1049 = vunpack.c.l.b16 %v146
    %v1050 = vunpack.c.l.b16 %v147
    %v1051 = vunpack.c.l.b16 %v148
    %v1052 = vunpack.c.l.b16 %v149
    %v1053 = vunpack.c.l.b16 %v150
    %v1054 = vunpack.c.l.b16 %v151
    %v1055 = vunpack.c.l.b16 %v152
    %v1056 = vunpack.c.l.b16 %v153
    %v1057 = vunpack.c.l.b16 %v154
    %v1058 = vunpack.c.l.b16 %v155
    %v1059 = vunpack.c.l.b16 %v156
    %v1060 = vunpack.c.l.b16 %v157
    %v1061 = vunpack.c.l.b16 %v158
    %v1062 = vunpack.c.l.b16 %v159
    %v1063 = vunpack.c.l.b16 %v160
    %v1064 = vunpack.c.l.b16 %v161
    %v1065 = vunpack.c.l.b16 %v162
    %v1066 = vunpack.c.l.b16 %v163
    %v1067 = vunpack.c.l.b16 %v164
    %v1068 = vunpack.c.l.b16 %v165
    %v1069 = vunpack.c.l.b16 %v166
    %v1070 = vunpack.c.l.b16 %v167
    %v1071 = vunpack.c.l.b16 %v168
    %v1072 = vunpack.c.l.b16 %v169
    %v1073 = vunpack.c.l.b16 %v170
    %v1074 = vunpack.c.l.b16 %v171
    %v1075 = vunpack.c.l.b16 %v172
    %v1076 = vunpack.c.l.b16 %v173
    %v1077 = vunpack.c.l.b16 %v174
    %v1078 = vunpack.c.l.b16 %v175
    %v1079 = vunpack.c.l.b16 %v176
    %v1080 = vunpack.c.l.b16 %v177
    %v1081 = vunpack.c.l.b16 %v178
    %v1082 = vunpack.c.l.b16 %v179
    %v1083 = vunpack.c.l.b16 %v180
    %v1084 = vunpack.c.l.b16 %v181
    %v1085 = vunpack.c.l.b16 %v182
    %v1086 = vunpack.c.l.b16 %v183
    %v1087 = vunpack.c.l.b16 %v184
    %v1088 = vunpack.c.l.b16 %v185
    %v1089 = vunpack.c.l.b16 %v186
    %v1090 = vunpack.c.l.b16 %v187
    %v1091 = vunpack.c.l.b16 %v188
    %v1092 = vunpack.c.l.b16 %v189
    %v1093 = vunpack.c.l.b16 %v190
    %v1094 = vunpack.c.l.b16 %v191
    %v1095 = vunpack.c.l.b16 %v192
    %v1096 = vunpack.c.l.b16 %v193
    %v1097 = vunpack.c.l.b16 %v194
    %v1098 = vunpack.c.l.b16 %v195
    %v1099 = vpack.c.b16 %v972, %v971
    %v1100 = vpack.c.b16 %v974, %v973
    %v1101 = vpack.c.b16 %v976, %v975
    %v1102 = vpack.c.b16 %v978, %v977
    %v1103 = vpack.c.b16 %v980, %v979
    %v1104 = vpack.c.b16 %v982, %v981
    %v1105 = vpack.c.b16 %v984, %v983
    %v1106 = vpack.c.b16 %v986, %v985
    %v1107 = vpack.c.b16 %v988, %v987
    %v1108 = vpack.c.b16 %v990, %v989
    %v1109 = vpack.c.b16 %v992, %v991
    %v1110 = vpack.c.b16 %v994, %v993
    %v1111 = vpack.c.b16 %v996, %v995
    %v1112 = vpack.c.b16 %v998, %v997
    %v1113 = vpack.c.b16 %v1000, %v999
    %v1114 = vpack.c.b16 %v1002, %v1001
    %v1115 = vpack.c.b16 %v1004, %v1003
    %v1116 = vpack.c.b16 %v1006, %v1005
    %v1117 = vpack.c.b16 %v1008, %v1007
    %v1118 = vpack.c.b16 %v1010, %v1009
    %v1119 = vpack.c.b16 %v1012, %v1011
    %v1120 = vpack.c.b16 %v1014, %v1013
    %v1121 = vpack.c.b16 %v1016, %v1015
    %v1122 = vpack.c.b16 %v1018, %v1017
    %v1123 = vpack.c.b16 %v1020, %v1019
    %v1124 = vpack.c.b16 %v1022, %v1021
    %v1125 = vpack.c.b16 %v1024, %v1023
    %v1126 = vpack.c.b16 %v1026, %v1025
    %v1127 = vpack.c.b16 %v1028, %v1027
    %v1128 = vpack.c.b16 %v1030, %v1029
    %v1129 = vpack.c.b16 %v1032, %v1031
    %v1130 = vpack.c.b16 %v1034, %v1033
    %v1131 = vpack.c.b16 %v1036, %v1035
    %v1132 = vpack.c.b16 %v1038, %v1037
    %v1133 = vpack.c.b16 %v1040, %v1039
    %v1134 = vpack.c.b16 %v1042, %v1041
    %v1135 = vpack.c.b16 %v1044, %v1043
    %v1136 = vpack.c.b16 %v1046, %v1045
    %v1137 = vpack.c.b16 %v1048, %v1047
    %v1138 = vpack.c.b16 %v1050, %v1049
    %v1139 = vpack.c.b16 %v1052, %v1051
    %v1140 = vpack.c.b16 %v1054, %v1053
    %v1141 = vpack.c.b16 %v1056, %v1055
    %v1142 = vpack.c.b16 %v1058, %v1057
    %v1143 = vpack.c.b16 %v1060, %v1059
    %v1144 = vpack.c.b16 %v1062, %v1061
    %v1145 = vpack.c.b16 %v1064, %v1063
    %v1146 = vpack.c.b16 %v1066, %v1065
    %v1147 = vpack.c.b16 %v1068, %v1067
    %v1148 = vpack.c.b16 %v1070, %v1069
    %v1149 = vpack.c.b16 %v1072, %v1071
    %v1150 = vpack.c.b16 %v1074, %v1073
    %v1151 = vpack.c.b16 %v1076, %v1075
    %v1152 = vpack.c.b16 %v1078, %v1077
    %v1153 = vpack.c.b16 %v1080, %v1079
    %v1154 = vpack.c.b16 %v1082, %v1081
    %v1155 = vpack.c.b16 %v1084, %v1083
    %v1156 = vpack.c.b16 %v1086, %v1085
    %v1157 = vpack.c.b16 %v1088, %v1087
    %v1158 = vpack.c.b16 %v1090, %v1089
    %v1159 = vpack.c.b16 %v1092, %v1091
    %v1160 = vpack.c.b16 %v1094, %v1093
    %v1161 = vpack.c.b16 %v1096, %v1095
    %v1162 = vpack.c.b16 %v1098, %v1097
    %1227 = vmatpush.bf16.msra.mxu0 %v1106
    %1228 = vmatpush.bf16.msra.mxu0 %v1105
    %1229 = vmatpush.bf16.msra.mxu0 %v1104
    %1230 = vmatpush.bf16.msra.mxu0 %v1103
    %1231 = vmatpush.bf16.msra.mxu0 %v1102
    %1232 = vmatpush.bf16.msra.mxu0 %v1101
    %1233 = vmatpush.bf16.msra.mxu0 %v1100
    %1234 = vmatpush.bf16.msra.mxu0 %v1099
    %1235 = vmatmul.bf16.gmra.mxu0 %v60
    %v1236 = vpop.f32.mrf.mxu0
    %v1237 = vadd.f32 %v840, %v1236
    %v1238 = vpop.f32.mrf.mxu0
    %1239 = vdwg.mxu0
    %1240 = vmatpush.bf16.msra.mxu0 %v1114
    %1241 = vmatpush.bf16.msra.mxu0 %v1113
    %1242 = vmatpush.bf16.msra.mxu0 %v1112
    %1243 = vmatpush.bf16.msra.mxu0 %v1111
    %1244 = vmatpush.bf16.msra.mxu0 %v1110
    %1245 = vmatpush.bf16.msra.mxu0 %v1109
    %1246 = vmatpush.bf16.msra.mxu0 %v1108
    %1247 = vmatpush.bf16.msra.mxu0 %v1107
    %1248 = vmatmul.bf16.gmra.mxu0 %v61
    %v1249 = vpop.f32.mrf.mxu0
    %v1250 = vadd.f32 %v1237, %v1249
    %v1251 = vpop.f32.mrf.mxu0
    %1252 = vdwg.mxu0
    %1253 = vmatpush.bf16.msra.mxu0 %v1122
    %1254 = vmatpush.bf16.msra.mxu0 %v1121
    %1255 = vmatpush.bf16.msra.mxu0 %v1120
    %1256 = vmatpush.bf16.msra.mxu0 %v1119
    %1257 = vmatpush.bf16.msra.mxu0 %v1118
    %1258 = vmatpush.bf16.msra.mxu0 %v1117
    %1259 = vmatpush.bf16.msra.mxu0 %v1116
    %1260 = vmatpush.bf16.msra.mxu0 %v1115
    %1261 = vmatmul.bf16.gmra.mxu0 %v62
    %v1262 = vpop.f32.mrf.mxu0
    %v1263 = vadd.f32 %v1250, %v1262
    %v1264 = vpop.f32.mrf.mxu0
    %1265 = vdwg.mxu0
    %1266 = vmatpush.bf16.msra.mxu0 %v1130
    %1267 = vmatpush.bf16.msra.mxu0 %v1129
    %1268 = vmatpush.bf16.msra.mxu0 %v1128
    %1269 = vmatpush.bf16.msra.mxu0 %v1127
    %1270 = vmatpush.bf16.msra.mxu0 %v1126
    %1271 = vmatpush.bf16.msra.mxu0 %v1125
    %1272 = vmatpush.bf16.msra.mxu0 %v1124
    %1273 = vmatpush.bf16.msra.mxu0 %v1123
    %1274 = vmatmul.bf16.gmra.mxu0 %v63
    %v1275 = vpop.f32.mrf.mxu0
    %v1276 = vadd.f32 %v1263, %v1275
    %v1277 = vpop.f32.mrf.mxu0
    %1278 = vdwg.mxu0
    %1279 = vmatpush.bf16.msra.mxu0 %v1138
    %1280 = vmatpush.bf16.msra.mxu0 %v1137
    %1281 = vmatpush.bf16.msra.mxu0 %v1136
    %1282 = vmatpush.bf16.msra.mxu0 %v1135
    %1283 = vmatpush.bf16.msra.mxu0 %v1134
    %1284 = vmatpush.bf16.msra.mxu0 %v1133
    %1285 = vmatpush.bf16.msra.mxu0 %v1132
    %1286 = vmatpush.bf16.msra.mxu0 %v1131
    %1287 = vmatmul.bf16.gmra.mxu0 %v64
    %v1288 = vpop.f32.mrf.mxu0
    %v1289 = vadd.f32 %v1276, %v1288
    %v1290 = vpop.f32.mrf.mxu0
    %1291 = vdwg.mxu0
    %1292 = vmatpush.bf16.msra.mxu0 %v1146
    %1293 = vmatpush.bf16.msra.mxu0 %v1145
    %1294 = vmatpush.bf16.msra.mxu0 %v1144
    %1295 = vmatpush.bf16.msra.mxu0 %v1143
    %1296 = vmatpush.bf16.msra.mxu0 %v1142
    %1297 = vmatpush.bf16.msra.mxu0 %v1141
    %1298 = vmatpush.bf16.msra.mxu0 %v1140
    %1299 = vmatpush.bf16.msra.mxu0 %v1139
    %1300 = vmatmul.bf16.gmra.mxu0 %v65
    %v1301 = vpop.f32.mrf.mxu0
    %v1302 = vadd.f32 %v1289, %v1301
    %v1303 = vpop.f32.mrf.mxu0
    %1304 = vdwg.mxu0
    %1305 = vmatpush.bf16.msra.mxu0 %v1154
    %1306 = vmatpush.bf16.msra.mxu0 %v1153
    %1307 = vmatpush.bf16.msra.mxu0 %v1152
    %1308 = vmatpush.bf16.msra.mxu0 %v1151
    %1309 = vmatpush.bf16.msra.mxu0 %v1150
    %1310 = vmatpush.bf16.msra.mxu0 %v1149
    %1311 = vmatpush.bf16.msra.mxu0 %v1148
    %1312 = vmatpush.bf16.msra.mxu0 %v1147
    %1313 = vmatmul.bf16.gmra.mxu0 %v66
    %v1314 = vpop.f32.mrf.mxu0
    %v1315 = vadd.f32 %v1302, %v1314
    %v1316 = vpop.f32.mrf.mxu0
    %1317 = vdwg.mxu0
    %1318 = vmatpush.bf16.msra.mxu0 %v1162
    %1319 = vmatpush.bf16.msra.mxu0 %v1161
    %1320 = vmatpush.bf16.msra.mxu0 %v1160
    %1321 = vmatpush.bf16.msra.mxu0 %v1159
    %1322 = vmatpush.bf16.msra.mxu0 %v1158
    %1323 = vmatpush.bf16.msra.mxu0 %v1157
    %1324 = vmatpush.bf16.msra.mxu0 %v1156
    %1325 = vmatpush.bf16.msra.mxu0 %v1155
    %1326 = vmatmul.bf16.gmra.mxu0 %v67
    %v1327 = vpop.f32.mrf.mxu0
    %v1328 = vadd.f32 %v1315, %v1327
    %v1329 = vpop.f32.mrf.mxu0
    %1330 = vdwg.mxu0
    %v1331 = vld [vmem:[%s2] sm:$0x3]
    %v1332 = vpack.c.bf16 %v1331, %v1331
    %v1333 = vld [vmem:[%s5] sm:$0xf]
    %v1334 = vld [vmem:[%s5 + $0x4] sm:$0xf]
    %v1335 = vld [vmem:[%s5 + $0x8] sm:$0xf]
    %v1336 = vld [vmem:[%s5 + $0xc] sm:$0xf]
    %v1337 = vld [vmem:[%s5 + $0x10] sm:$0xf]
    %v1338 = vld [vmem:[%s5 + $0x14] sm:$0xf]
    %v1339 = vld [vmem:[%s5 + $0x18] sm:$0xf]
    %v1340 = vld [vmem:[%s5 + $0x1c] sm:$0xf]
    %v1341 = vld [vmem:[%s5 + $0x20] sm:$0xf]
    %v1342 = vld [vmem:[%s5 + $0x24] sm:$0xf]
    %v1343 = vld [vmem:[%s5 + $0x28] sm:$0xf]
    %v1344 = vld [vmem:[%s5 + $0x2c] sm:$0x1]
    %v1357 = vunpack.c.l.b16 %v1333
    %v1358 = vunpack.c.l.b16 %v1334
    %v1359 = vunpack.c.l.b16 %v1335
    %v1360 = vunpack.c.l.b16 %v1336
    %v1361 = vunpack.c.l.b16 %v1337
    %v1362 = vunpack.c.l.b16 %v1338
    %v1363 = vunpack.c.l.b16 %v1339
    %v1364 = vunpack.c.l.b16 %v1340
    %v1365 = vunpack.c.l.b16 %v1341
    %v1366 = vunpack.c.l.b16 %v1342
    %v1367 = vunpack.c.l.b16 %v1343
    %v1368 = vunpack.c.l.b16 %v1344
    %v1369 = vpack.c.b16 %v1358, %v1357
    %v1370 = vpack.c.b16 %v1360, %v1359
    %v1371 = vpack.c.b16 %v1362, %v1361
    %v1372 = vpack.c.b16 %v1364, %v1363
    %v1373 = vpack.c.b16 %v1366, %v1365
    %v1374 = vpack.c.b16 %v1368, %v1367
    %vm1380 = vcmask 728064
    %v1382 = vsel %vm1380, %v1332, 0
    %vm1384 = vcmask 1043456
    %vm1385 = vcmask 1044480
    %v1386 = vsel %vm1384, 4294967295, 65535
    %v1387 = vsel %vm1385, %v1386, 0
    %v1389 = vand.u32 %v1374, %v1387
    %1391 = vmatpush.bf16.msra.mxu0 0
    %1392 = vmatpush.bf16.msra.mxu0 0
    %1393 = vmatpush.bf16.msra.mxu0 %v1389
    %1394 = vmatpush.bf16.msra.mxu0 %v1373
    %1395 = vmatpush.bf16.msra.mxu0 %v1372
    %1396 = vmatpush.bf16.msra.mxu0 %v1371
    %1397 = vmatpush.bf16.msra.mxu0 %v1370
    %1398 = vmatpush.bf16.msra.mxu0 %v1369
    %1399 = vmatmul.bf16.gmra.mxu0 %v1382
    %v1400 = vpop.f32.mrf.mxu0
    %v1401 = vadd.f32 0.0, %v1400
    %v1402 = vpop.f32.mrf.mxu0
    %1403 = vdwg.mxu0
    %v1404 = vadd.f32 %v1328, %v1401
    %v1405 = vld [vmem:[%s6] sm:$0x1]
    %v1407 = vperm.slane %v1405, 0
    %v1409 = vadd.f32 %v1404, %v1407
    %v1410 = vtanh.pop %v1409
    %vm1411 = vcmask 123904
    %1412 = vst.msk [vmem:[#allocation2] sm:$0x3] %vm1411, %v1410
    %v1413 = vld [vmem:[%s7] sm:$0xff]
    %v1414 = vld [vmem:[%s7 + $0x8] sm:$0xff]
    %v1415 = vld [vmem:[%s8] sm:$0x1]
    %v1417 = vperm.slane %v1415, 0
    %vm1419 = vcmask 130048
    %v1421 = vsel %vm1419, %v1410, 0
    %1423 = vmatpush.msra.mxu0 0.0
    %1424 = vmatpush.msra.mxu0 0.0
    %1425 = vmatpush.msra.mxu0 0.0
    %1426 = vmatpush.msra.mxu0 0.0
    %1427 = vmatpush.msra.mxu0 0.0
    %1428 = vmatpush.msra.mxu0 0.0
    %1429 = vmatpush.msra.mxu0 0.0
    %1430 = vmatpush.msra.mxu0 0.0
    %1431 = vmatpush.msra.mxu0 0.0
    %1432 = vmatpush.msra.mxu0 0.0
    %1433 = vmatpush.msra.mxu0 0.0
    %1434 = vmatpush.msra.mxu0 0.0
    %1435 = vmatpush.msra.mxu0 0.0
    %1436 = vmatpush.msra.mxu0 0.0
    %1437 = vmatpush.msra.mxu0 %v1414
    %1438 = vmatpush.msra.mxu0 %v1413
    %1439 = vmatmul.f32.gmra.mxu0 %v1421
    %v1440 = vpop.f32.mrf.mxu0
    %v1441 = vadd.f32 %v1417, %v1440
    %1442 = vdwg.mxu0
    %vm1443 = vcmask 58368
    %v1444 = vsel %vm1443, %v1441, -inf
    %1445 = vmax.xlane.f32.xlu0 %v1444
    %v1446 = vpop.xlane.xlu0 %1445
    %v1447 = vsub.f32 %v1441, %v1446
    %v1448 = vmul.f32 %v1447, 1.442695
    %v1449 = vpow.pop %v1448
    %v1450 = vsel %vm1443, %v1449, 0.0
    %1451 = vadd.xlane.f32.xlu0 %v1450
    %v1452 = vpop.xlane.xlu0 %1451
    %v1453 = vrcp.pop %v1452
    %v1454 = vmul.f32 %v1452, %v1453
    %v1455 = vsub.f32 1.0, %v1454
    %v1456 = vmul.f32 %v1453, %v1455
    %v1457 = vadd.f32 %v1453, %v1456
    %vm1458 = vweird.f32 %v1452
    %vm1459 = vweird.f32 %v1453
    %vm1460 = vmor %vm1458, %vm1459
    %v1461 = vsel %vm1460, %v1453, %v1457
    %v1462 = vand.u32 2147483647, %v1452
    %vm1463 = vcmp.eq.f32.partialorder %v1462, 8.507059e+37
    %v1464 = vand.u32 %v1452, 2147483648
    %v1465 = vor.u32 1.1754944e-38, %v1464
    %v1466 = vsel %vm1463, %v1465, %v1461
    %v1467 = vmul.f32 %v1449, %v1466
    %1468 = vst.msk [vmem:[#allocation4] sm:$0x3] %vm1443, %v1467
    // Predicated region
    $region38: #{tpu_custom_call.1} parent=1 // pred_check
      _
    $region39: #{tpu_custom_call.1} parent=1 // pred_check_branch
      %1470 = sbr.rel (0) target = $region41
    $region40: #{tpu_custom_call.1} parent=1 // pred_region
      %1472 = vsyncadd [#allocation3], 0
      %s1474 = sshll.u32 [#allocation2], 4
      %s1475 = int_to_ptr.vmem [resolvable:$true] %s1474
      %s1476 = sshll.u32 %s9, 4
      %s1477 = int_to_ptr.hbm [resolvable:$true] %s1476
      %1479 = dma.vmem_to_hbm [thread:$0]  %s1475, 32, %s1477, [#allocation3]
    $region41: #{tpu_custom_call.1} parent=1 // pred_fallthru
      _
    // Predicated region
    $region42: #{tpu_custom_call.1} parent=1 // pred_check
      _
    $region43: #{tpu_custom_call.1} parent=1 // pred_check_branch
      %1481 = sbr.rel (0) target = $region45
    $region44: #{tpu_custom_call.1} parent=1 // pred_region
      %1483 = vsyncadd [#allocation5], 0
      %s1485 = sshll.u32 [#allocation4], 4
      %s1486 = int_to_ptr.vmem [resolvable:$true] %s1485
      %s1487 = sshll.u32 %s10, 4
      %s1488 = int_to_ptr.hbm [resolvable:$true] %s1487
      %1490 = dma.vmem_to_hbm [thread:$0]  %s1486, 32, %s1488, [#allocation5]
    $region45: #{tpu_custom_call.1} parent=1 // pred_fallthru
      _
    // Predicated region
    $region46: #{tpu_custom_call.1} parent=1 // pred_check
      _
    $region47: #{tpu_custom_call.1} parent=1 // pred_check_branch
      %1492 = sbr.rel (0) target = $region49
    $region48: #{tpu_custom_call.1} parent=1 // pred_region
      %1494 = dma.done [#allocation3], 32
    $region49: #{tpu_custom_call.1} parent=1 // pred_fallthru
      _
    // Predicated region
    $region50: #{tpu_custom_call.1} parent=1 // pred_check
      _
    $region51: #{tpu_custom_call.1} parent=1 // pred_check_branch
      %1496 = sbr.rel (0) target = $region53
    $region52: #{tpu_custom_call.1} parent=1 // pred_region
      %1498 = dma.done [#allocation5], 32
    $region53: #{tpu_custom_call.1} parent=1 // pred_fallthru
      _
    %1499 = vsyncpa [#allocation3], 1
    %1500 = vsyncpa [#allocation5], 1

</llo_original>
